<compile_context>
chip_gen: v5e
topology: v5e:2x2
jax: 0.10.0
libtpu: 0.0.40
codegen_flags: <defaults>
</compile_context>

<pallas_src>
import jax
import jax.numpy as jnp
from jax.experimental import pallas as pl
from jax.experimental.pallas import tpu as pltpu


def _embedding_gather_kernel(ids_ref, w_hbm, o_ref, sem):
    """DMA-gather rows of the HBM embedding table into the output VMEM block.

    ids_ref : SMEM int32[N_padded]        (scalar-prefetched ids)
    w_hbm   : HBM  f32[V, E]              (memory_space=pl.ANY, manual DMA)
    o_ref   : VMEM f32[tile_n, E]         (pipelined output block)
    sem     : DMA semaphores, shape (tile_n,)
    """
    i = pl.program_id(0)
    tile_n = o_ref.shape[0]
    base = i * tile_n

    # Issue all row DMAs first so they overlap, then wait on each.
    for j in range(tile_n):
        row = ids_ref[base + j]
        pltpu.make_async_copy(
            w_hbm.at[pl.ds(row, 1), :],
            o_ref.at[pl.ds(j, 1), :],
            sem.at[j],
        ).start()
    for j in range(tile_n):
        pltpu.make_async_copy(
            w_hbm.at[pl.ds(0, 1), :],        # shape-only; completion is on sem[j]
            o_ref.at[pl.ds(j, 1), :],
            sem.at[j],
        ).wait()


def embedding_lookup(ids_flat, weight, *, tile_n=8):
    """ids_flat: (N,) integer ids, weight: (V, E) float32 -> (N, E) float32."""
    n = ids_flat.shape[0]
    v, e = weight.shape
    assert v < 2 ** 31, "vocab_size must be int32-indexable"
    assert tile_n % 8 == 0, "row tile must be a multiple of 8 (sublane)"

    # torch .long() -> int32 indices; clamp so no DMA can go out of bounds.
    ids = jnp.clip(jnp.asarray(ids_flat).astype(jnp.int32), 0, v - 1)

    # Pad N up to a multiple of the row tile (padded rows gather row 0, then
    # get sliced off).
    n_pad = pl.cdiv(n, tile_n) * tile_n
    if n_pad != n:
        ids = jnp.concatenate([ids, jnp.zeros((n_pad - n,), jnp.int32)])

    itemsize = jnp.dtype(weight.dtype).itemsize
    out = pl.pallas_call(
        _embedding_gather_kernel,
        out_shape=jax.ShapeDtypeStruct((n_pad, e), weight.dtype),
        grid_spec=pltpu.PrefetchScalarGridSpec(
            num_scalar_prefetch=1,                          # ids -> SMEM
            grid=(n_pad // tile_n,),
            in_specs=[pl.BlockSpec(memory_space=pl.ANY)],   # table stays in HBM
            out_specs=pl.BlockSpec((tile_n, e), lambda i, ids: (i, 0)),
            scratch_shapes=[pltpu.SemaphoreType.DMA((tile_n,))],
        ),
        compiler_params=pltpu.CompilerParams(
            dimension_semantics=("parallel",)),
        cost_estimate=pl.CostEstimate(
            flops=0,
            transcendentals=0,
            bytes_accessed=2 * n_pad * e * itemsize),       # read rows + write out
    )(ids, weight)
    return out[:n]


class Item2Vec:
    """JAX/Pallas re-implementation of the PyTorch Item2Vec module."""

    def __init__(self, padding_idx, vocab_size=128, embedding_size=128, *, key):
        self.name = "i2v"
        self.vocab_size = vocab_size
        self.embedding_size = embedding_size
        self.padding_idx = padding_idx

        k_t, k_c = jax.random.split(key)
        bound = 0.5 / embedding_size

        def init_table(k):
            body = jax.random.uniform(
                k, (vocab_size - 1, embedding_size),
                dtype=jnp.float32, minval=-bound, maxval=bound)
            # PyTorch init: last row is explicitly zeroed.
            return jnp.concatenate(
                [body, jnp.zeros((1, embedding_size), jnp.float32)], axis=0)

        self.tvectors = init_table(k_t)   # (V, E)
        self.cvectors = init_table(k_c)   # (V, E)

    def _lookup(self, table, data):
        ids = jnp.asarray(data).astype(jnp.int32)
        flat = ids.reshape(-1)
        out = embedding_lookup(flat, table)
        return out.reshape(ids.shape + (self.embedding_size,))

    def forward_t(self, data):
        return self._lookup(self.tvectors, data)

    def forward_c(self, data):
        return self._lookup(self.cvectors, data)

    def forward(self, data):
        return self.forward_t(data)

    __call__ = forward


if __name__ == "__main__":
    key = jax.random.PRNGKey(0)
    k_model, k_data = jax.random.split(key)

    vocab_size = 128
    embedding_size = 128
    padding_idx = vocab_size - 1

    model = Item2Vec(padding_idx, vocab_size=vocab_size,
                     embedding_size=embedding_size, key=k_model)

    # data: (batch=2, seq=8) integer item ids, including the padding index.
    data = jax.random.randint(k_data, (2, 8), 0, vocab_size, dtype=jnp.int32)
    data = data.at[0, 0].set(padding_idx)

    out = model(data)
    out = jax.block_until_ready(out)
    assert out.shape == (2, 8, embedding_size)

    # Cross-check against a plain-JAX embedding lookup.
    ref = jnp.take(model.tvectors, data.reshape(-1), axis=0).reshape(out.shape)
    assert jnp.allclose(out, ref), "Pallas embedding lookup mismatch"
    assert jnp.allclose(out[0, 0], 0.0), "padding row should be all zeros"

    # Also exercise the context-vector lookup path once.
    out_c = jax.block_until_ready(model.forward_c(data))
    ref_c = jnp.take(model.cvectors, data.reshape(-1), axis=0).reshape(out_c.shape)
    assert jnp.allclose(out_c, ref_c), "Pallas cvectors lookup mismatch"

    print("KERNEL_OK")
</pallas_src>

<mosaic_0001>
module attributes {stable_mosaic.version = 11 : i64} {
  func.func @_embedding_gather_kernel(%arg0: i32, %arg1: memref<16xi32, #tpu.memory_space<smem>>, %arg2: memref<128x128xf32, #tpu.memory_space<any>>, %arg3: memref<8x128xf32, #tpu.memory_space<vmem>>, %arg4: memref<8x!tpu.dma_semaphore, #tpu.memory_space<semaphore_mem>>) attributes {dimension_semantics = [#tpu.dimension_semantics<parallel>], iteration_bounds = array<i64: 2>, scalar_prefetch = 1 : i64, scratch_operands = 1 : i64, tpu.core_type = #tpu.core_type<tc>, window_params = [{}, {transform_indices = @transform_1, window_bounds = array<i64: 8, 128>}]} {
    %c8_i32 = arith.constant 8 : i32
    %0 = arith.muli %arg0, %c8_i32 : i32
    %c0_i32 = arith.constant 0 : i32
    %1 = arith.addi %0, %c0_i32 : i32
    %2 = arith.index_cast %1 : i32 to index
    %3 = memref.load %arg1[%2] : memref<16xi32, #tpu.memory_space<smem>>
    %c0_i32_0 = arith.constant 0 : i32
    %c0_i32_1 = arith.constant 0 : i32
    %4 = tpu.memref_slice %arg2[%3, %c0_i32_1] : memref<128x128xf32, #tpu.memory_space<any>> -> memref<1x128xf32, #tpu.memory_space<any>>
    %c0_i32_2 = arith.constant 0 : i32
    %c0_i32_3 = arith.constant 0 : i32
    %5 = tpu.memref_slice %arg3[%c0_i32_2, %c0_i32_3] : memref<8x128xf32, #tpu.memory_space<vmem>> -> memref<1x128xf32, #tpu.memory_space<vmem>>
    %6 = tpu.memref_slice %arg4[%c0_i32_0] : memref<8x!tpu.dma_semaphore, #tpu.memory_space<semaphore_mem>> -> memref<1x!tpu.dma_semaphore, #tpu.memory_space<semaphore_mem>>
    %7 = tpu.memref_squeeze %6 : memref<1x!tpu.dma_semaphore, #tpu.memory_space<semaphore_mem>> -> memref<!tpu.dma_semaphore, #tpu.memory_space<semaphore_mem>>
    tpu.enqueue_dma source(%4 : memref<1x128xf32, #tpu.memory_space<any>>) target(%5 : memref<1x128xf32, #tpu.memory_space<vmem>>) target_semaphore(%7 : memref<!tpu.dma_semaphore, #tpu.memory_space<semaphore_mem>>)
    %c1_i32 = arith.constant 1 : i32
    %8 = arith.addi %0, %c1_i32 : i32
    %9 = arith.index_cast %8 : i32 to index
    %10 = memref.load %arg1[%9] : memref<16xi32, #tpu.memory_space<smem>>
    %c1_i32_4 = arith.constant 1 : i32
    %c0_i32_5 = arith.constant 0 : i32
    %11 = tpu.memref_slice %arg2[%10, %c0_i32_5] : memref<128x128xf32, #tpu.memory_space<any>> -> memref<1x128xf32, #tpu.memory_space<any>>
    %c1_i32_6 = arith.constant 1 : i32
    %c0_i32_7 = arith.constant 0 : i32
    %12 = tpu.memref_slice %arg3[%c1_i32_6, %c0_i32_7] : memref<8x128xf32, #tpu.memory_space<vmem>> -> memref<1x128xf32, #tpu.memory_space<vmem>>
    %13 = tpu.memref_slice %arg4[%c1_i32_4] : memref<8x!tpu.dma_semaphore, #tpu.memory_space<semaphore_mem>> -> memref<1x!tpu.dma_semaphore, #tpu.memory_space<semaphore_mem>>
    %14 = tpu.memref_squeeze %13 : memref<1x!tpu.dma_semaphore, #tpu.memory_space<semaphore_mem>> -> memref<!tpu.dma_semaphore, #tpu.memory_space<semaphore_mem>>
    tpu.enqueue_dma source(%11 : memref<1x128xf32, #tpu.memory_space<any>>) target(%12 : memref<1x128xf32, #tpu.memory_space<vmem>>) target_semaphore(%14 : memref<!tpu.dma_semaphore, #tpu.memory_space<semaphore_mem>>)
    %c2_i32 = arith.constant 2 : i32
    %15 = arith.addi %0, %c2_i32 : i32
    %16 = arith.index_cast %15 : i32 to index
    %17 = memref.load %arg1[%16] : memref<16xi32, #tpu.memory_space<smem>>
    %c2_i32_8 = arith.constant 2 : i32
    %c0_i32_9 = arith.constant 0 : i32
    %18 = tpu.memref_slice %arg2[%17, %c0_i32_9] : memref<128x128xf32, #tpu.memory_space<any>> -> memref<1x128xf32, #tpu.memory_space<any>>
    %c2_i32_10 = arith.constant 2 : i32
    %c0_i32_11 = arith.constant 0 : i32
    %19 = tpu.memref_slice %arg3[%c2_i32_10, %c0_i32_11] : memref<8x128xf32, #tpu.memory_space<vmem>> -> memref<1x128xf32, #tpu.memory_space<vmem>>
    %20 = tpu.memref_slice %arg4[%c2_i32_8] : memref<8x!tpu.dma_semaphore, #tpu.memory_space<semaphore_mem>> -> memref<1x!tpu.dma_semaphore, #tpu.memory_space<semaphore_mem>>
    %21 = tpu.memref_squeeze %20 : memref<1x!tpu.dma_semaphore, #tpu.memory_space<semaphore_mem>> -> memref<!tpu.dma_semaphore, #tpu.memory_space<semaphore_mem>>
    tpu.enqueue_dma source(%18 : memref<1x128xf32, #tpu.memory_space<any>>) target(%19 : memref<1x128xf32, #tpu.memory_space<vmem>>) target_semaphore(%21 : memref<!tpu.dma_semaphore, #tpu.memory_space<semaphore_mem>>)
    %c3_i32 = arith.constant 3 : i32
    %22 = arith.addi %0, %c3_i32 : i32
    %23 = arith.index_cast %22 : i32 to index
    %24 = memref.load %arg1[%23] : memref<16xi32, #tpu.memory_space<smem>>
    %c3_i32_12 = arith.constant 3 : i32
    %c0_i32_13 = arith.constant 0 : i32
    %25 = tpu.memref_slice %arg2[%24, %c0_i32_13] : memref<128x128xf32, #tpu.memory_space<any>> -> memref<1x128xf32, #tpu.memory_space<any>>
    %c3_i32_14 = arith.constant 3 : i32
    %c0_i32_15 = arith.constant 0 : i32
    %26 = tpu.memref_slice %arg3[%c3_i32_14, %c0_i32_15] : memref<8x128xf32, #tpu.memory_space<vmem>> -> memref<1x128xf32, #tpu.memory_space<vmem>>
    %27 = tpu.memref_slice %arg4[%c3_i32_12] : memref<8x!tpu.dma_semaphore, #tpu.memory_space<semaphore_mem>> -> memref<1x!tpu.dma_semaphore, #tpu.memory_space<semaphore_mem>>
    %28 = tpu.memref_squeeze %27 : memref<1x!tpu.dma_semaphore, #tpu.memory_space<semaphore_mem>> -> memref<!tpu.dma_semaphore, #tpu.memory_space<semaphore_mem>>
    tpu.enqueue_dma source(%25 : memref<1x128xf32, #tpu.memory_space<any>>) target(%26 : memref<1x128xf32, #tpu.memory_space<vmem>>) target_semaphore(%28 : memref<!tpu.dma_semaphore, #tpu.memory_space<semaphore_mem>>)
    %c4_i32 = arith.constant 4 : i32
    %29 = arith.addi %0, %c4_i32 : i32
    %30 = arith.index_cast %29 : i32 to index
    %31 = memref.load %arg1[%30] : memref<16xi32, #tpu.memory_space<smem>>
    %c4_i32_16 = arith.constant 4 : i32
    %c0_i32_17 = arith.constant 0 : i32
    %32 = tpu.memref_slice %arg2[%31, %c0_i32_17] : memref<128x128xf32, #tpu.memory_space<any>> -> memref<1x128xf32, #tpu.memory_space<any>>
    %c4_i32_18 = arith.constant 4 : i32
    %c0_i32_19 = arith.constant 0 : i32
    %33 = tpu.memref_slice %arg3[%c4_i32_18, %c0_i32_19] : memref<8x128xf32, #tpu.memory_space<vmem>> -> memref<1x128xf32, #tpu.memory_space<vmem>>
    %34 = tpu.memref_slice %arg4[%c4_i32_16] : memref<8x!tpu.dma_semaphore, #tpu.memory_space<semaphore_mem>> -> memref<1x!tpu.dma_semaphore, #tpu.memory_space<semaphore_mem>>
    %35 = tpu.memref_squeeze %34 : memref<1x!tpu.dma_semaphore, #tpu.memory_space<semaphore_mem>> -> memref<!tpu.dma_semaphore, #tpu.memory_space<semaphore_mem>>
    tpu.enqueue_dma source(%32 : memref<1x128xf32, #tpu.memory_space<any>>) target(%33 : memref<1x128xf32, #tpu.memory_space<vmem>>) target_semaphore(%35 : memref<!tpu.dma_semaphore, #tpu.memory_space<semaphore_mem>>)
    %c5_i32 = arith.constant 5 : i32
    %36 = arith.addi %0, %c5_i32 : i32
    %37 = arith.index_cast %36 : i32 to index
    %38 = memref.load %arg1[%37] : memref<16xi32, #tpu.memory_space<smem>>
    %c5_i32_20 = arith.constant 5 : i32
    %c0_i32_21 = arith.constant 0 : i32
    %39 = tpu.memref_slice %arg2[%38, %c0_i32_21] : memref<128x128xf32, #tpu.memory_space<any>> -> memref<1x128xf32, #tpu.memory_space<any>>
    %c5_i32_22 = arith.constant 5 : i32
    %c0_i32_23 = arith.constant 0 : i32
    %40 = tpu.memref_slice %arg3[%c5_i32_22, %c0_i32_23] : memref<8x128xf32, #tpu.memory_space<vmem>> -> memref<1x128xf32, #tpu.memory_space<vmem>>
    %41 = tpu.memref_slice %arg4[%c5_i32_20] : memref<8x!tpu.dma_semaphore, #tpu.memory_space<semaphore_mem>> -> memref<1x!tpu.dma_semaphore, #tpu.memory_space<semaphore_mem>>
    %42 = tpu.memref_squeeze %41 : memref<1x!tpu.dma_semaphore, #tpu.memory_space<semaphore_mem>> -> memref<!tpu.dma_semaphore, #tpu.memory_space<semaphore_mem>>
    tpu.enqueue_dma source(%39 : memref<1x128xf32, #tpu.memory_space<any>>) target(%40 : memref<1x128xf32, #tpu.memory_space<vmem>>) target_semaphore(%42 : memref<!tpu.dma_semaphore, #tpu.memory_space<semaphore_mem>>)
    %c6_i32 = arith.constant 6 : i32
    %43 = arith.addi %0, %c6_i32 : i32
    %44 = arith.index_cast %43 : i32 to index
    %45 = memref.load %arg1[%44] : memref<16xi32, #tpu.memory_space<smem>>
    %c6_i32_24 = arith.constant 6 : i32
    %c0_i32_25 = arith.constant 0 : i32
    %46 = tpu.memref_slice %arg2[%45, %c0_i32_25] : memref<128x128xf32, #tpu.memory_space<any>> -> memref<1x128xf32, #tpu.memory_space<any>>
    %c6_i32_26 = arith.constant 6 : i32
    %c0_i32_27 = arith.constant 0 : i32
    %47 = tpu.memref_slice %arg3[%c6_i32_26, %c0_i32_27] : memref<8x128xf32, #tpu.memory_space<vmem>> -> memref<1x128xf32, #tpu.memory_space<vmem>>
    %48 = tpu.memref_slice %arg4[%c6_i32_24] : memref<8x!tpu.dma_semaphore, #tpu.memory_space<semaphore_mem>> -> memref<1x!tpu.dma_semaphore, #tpu.memory_space<semaphore_mem>>
    %49 = tpu.memref_squeeze %48 : memref<1x!tpu.dma_semaphore, #tpu.memory_space<semaphore_mem>> -> memref<!tpu.dma_semaphore, #tpu.memory_space<semaphore_mem>>
    tpu.enqueue_dma source(%46 : memref<1x128xf32, #tpu.memory_space<any>>) target(%47 : memref<1x128xf32, #tpu.memory_space<vmem>>) target_semaphore(%49 : memref<!tpu.dma_semaphore, #tpu.memory_space<semaphore_mem>>)
    %c7_i32 = arith.constant 7 : i32
    %50 = arith.addi %0, %c7_i32 : i32
    %51 = arith.index_cast %50 : i32 to index
    %52 = memref.load %arg1[%51] : memref<16xi32, #tpu.memory_space<smem>>
    %c7_i32_28 = arith.constant 7 : i32
    %c0_i32_29 = arith.constant 0 : i32
    %53 = tpu.memref_slice %arg2[%52, %c0_i32_29] : memref<128x128xf32, #tpu.memory_space<any>> -> memref<1x128xf32, #tpu.memory_space<any>>
    %c7_i32_30 = arith.constant 7 : i32
    %c0_i32_31 = arith.constant 0 : i32
    %54 = tpu.memref_slice %arg3[%c7_i32_30, %c0_i32_31] : memref<8x128xf32, #tpu.memory_space<vmem>> -> memref<1x128xf32, #tpu.memory_space<vmem>>
    %55 = tpu.memref_slice %arg4[%c7_i32_28] : memref<8x!tpu.dma_semaphore, #tpu.memory_space<semaphore_mem>> -> memref<1x!tpu.dma_semaphore, #tpu.memory_space<semaphore_mem>>
    %56 = tpu.memref_squeeze %55 : memref<1x!tpu.dma_semaphore, #tpu.memory_space<semaphore_mem>> -> memref<!tpu.dma_semaphore, #tpu.memory_space<semaphore_mem>>
    tpu.enqueue_dma source(%53 : memref<1x128xf32, #tpu.memory_space<any>>) target(%54 : memref<1x128xf32, #tpu.memory_space<vmem>>) target_semaphore(%56 : memref<!tpu.dma_semaphore, #tpu.memory_space<semaphore_mem>>)
    %c0_i32_32 = arith.constant 0 : i32
    %c0_i32_33 = arith.constant 0 : i32
    %c0_i32_34 = arith.constant 0 : i32
    %57 = tpu.memref_slice %arg2[%c0_i32_33, %c0_i32_34] : memref<128x128xf32, #tpu.memory_space<any>> -> memref<1x128xf32, #tpu.memory_space<any>>
    %c0_i32_35 = arith.constant 0 : i32
    %c0_i32_36 = arith.constant 0 : i32
    %58 = tpu.memref_slice %arg3[%c0_i32_35, %c0_i32_36] : memref<8x128xf32, #tpu.memory_space<vmem>> -> memref<1x128xf32, #tpu.memory_space<vmem>>
    %59 = tpu.memref_slice %arg4[%c0_i32_32] : memref<8x!tpu.dma_semaphore, #tpu.memory_space<semaphore_mem>> -> memref<1x!tpu.dma_semaphore, #tpu.memory_space<semaphore_mem>>
    %60 = tpu.memref_squeeze %59 : memref<1x!tpu.dma_semaphore, #tpu.memory_space<semaphore_mem>> -> memref<!tpu.dma_semaphore, #tpu.memory_space<semaphore_mem>>
    tpu.wait_dma2 semaphore(%60 : memref<!tpu.dma_semaphore, #tpu.memory_space<semaphore_mem>>) src(%57 : memref<1x128xf32, #tpu.memory_space<any>>) dst(%58 : memref<1x128xf32, #tpu.memory_space<vmem>>)
    %c1_i32_37 = arith.constant 1 : i32
    %c0_i32_38 = arith.constant 0 : i32
    %c0_i32_39 = arith.constant 0 : i32
    %61 = tpu.memref_slice %arg2[%c0_i32_38, %c0_i32_39] : memref<128x128xf32, #tpu.memory_space<any>> -> memref<1x128xf32, #tpu.memory_space<any>>
    %c1_i32_40 = arith.constant 1 : i32
    %c0_i32_41 = arith.constant 0 : i32
    %62 = tpu.memref_slice %arg3[%c1_i32_40, %c0_i32_41] : memref<8x128xf32, #tpu.memory_space<vmem>> -> memref<1x128xf32, #tpu.memory_space<vmem>>
    %63 = tpu.memref_slice %arg4[%c1_i32_37] : memref<8x!tpu.dma_semaphore, #tpu.memory_space<semaphore_mem>> -> memref<1x!tpu.dma_semaphore, #tpu.memory_space<semaphore_mem>>
    %64 = tpu.memref_squeeze %63 : memref<1x!tpu.dma_semaphore, #tpu.memory_space<semaphore_mem>> -> memref<!tpu.dma_semaphore, #tpu.memory_space<semaphore_mem>>
    tpu.wait_dma2 semaphore(%64 : memref<!tpu.dma_semaphore, #tpu.memory_space<semaphore_mem>>) src(%61 : memref<1x128xf32, #tpu.memory_space<any>>) dst(%62 : memref<1x128xf32, #tpu.memory_space<vmem>>)
    %c2_i32_42 = arith.constant 2 : i32
    %c0_i32_43 = arith.constant 0 : i32
    %c0_i32_44 = arith.constant 0 : i32
    %65 = tpu.memref_slice %arg2[%c0_i32_43, %c0_i32_44] : memref<128x128xf32, #tpu.memory_space<any>> -> memref<1x128xf32, #tpu.memory_space<any>>
    %c2_i32_45 = arith.constant 2 : i32
    %c0_i32_46 = arith.constant 0 : i32
    %66 = tpu.memref_slice %arg3[%c2_i32_45, %c0_i32_46] : memref<8x128xf32, #tpu.memory_space<vmem>> -> memref<1x128xf32, #tpu.memory_space<vmem>>
    %67 = tpu.memref_slice %arg4[%c2_i32_42] : memref<8x!tpu.dma_semaphore, #tpu.memory_space<semaphore_mem>> -> memref<1x!tpu.dma_semaphore, #tpu.memory_space<semaphore_mem>>
    %68 = tpu.memref_squeeze %67 : memref<1x!tpu.dma_semaphore, #tpu.memory_space<semaphore_mem>> -> memref<!tpu.dma_semaphore, #tpu.memory_space<semaphore_mem>>
    tpu.wait_dma2 semaphore(%68 : memref<!tpu.dma_semaphore, #tpu.memory_space<semaphore_mem>>) src(%65 : memref<1x128xf32, #tpu.memory_space<any>>) dst(%66 : memref<1x128xf32, #tpu.memory_space<vmem>>)
    %c3_i32_47 = arith.constant 3 : i32
    %c0_i32_48 = arith.constant 0 : i32
    %c0_i32_49 = arith.constant 0 : i32
    %69 = tpu.memref_slice %arg2[%c0_i32_48, %c0_i32_49] : memref<128x128xf32, #tpu.memory_space<any>> -> memref<1x128xf32, #tpu.memory_space<any>>
    %c3_i32_50 = arith.constant 3 : i32
    %c0_i32_51 = arith.constant 0 : i32
    %70 = tpu.memref_slice %arg3[%c3_i32_50, %c0_i32_51] : memref<8x128xf32, #tpu.memory_space<vmem>> -> memref<1x128xf32, #tpu.memory_space<vmem>>
    %71 = tpu.memref_slice %arg4[%c3_i32_47] : memref<8x!tpu.dma_semaphore, #tpu.memory_space<semaphore_mem>> -> memref<1x!tpu.dma_semaphore, #tpu.memory_space<semaphore_mem>>
    %72 = tpu.memref_squeeze %71 : memref<1x!tpu.dma_semaphore, #tpu.memory_space<semaphore_mem>> -> memref<!tpu.dma_semaphore, #tpu.memory_space<semaphore_mem>>
    tpu.wait_dma2 semaphore(%72 : memref<!tpu.dma_semaphore, #tpu.memory_space<semaphore_mem>>) src(%69 : memref<1x128xf32, #tpu.memory_space<any>>) dst(%70 : memref<1x128xf32, #tpu.memory_space<vmem>>)
    %c4_i32_52 = arith.constant 4 : i32
    %c0_i32_53 = arith.constant 0 : i32
    %c0_i32_54 = arith.constant 0 : i32
    %73 = tpu.memref_slice %arg2[%c0_i32_53, %c0_i32_54] : memref<128x128xf32, #tpu.memory_space<any>> -> memref<1x128xf32, #tpu.memory_space<any>>
    %c4_i32_55 = arith.constant 4 : i32
    %c0_i32_56 = arith.constant 0 : i32
    %74 = tpu.memref_slice %arg3[%c4_i32_55, %c0_i32_56] : memref<8x128xf32, #tpu.memory_space<vmem>> -> memref<1x128xf32, #tpu.memory_space<vmem>>
    %75 = tpu.memref_slice %arg4[%c4_i32_52] : memref<8x!tpu.dma_semaphore, #tpu.memory_space<semaphore_mem>> -> memref<1x!tpu.dma_semaphore, #tpu.memory_space<semaphore_mem>>
    %76 = tpu.memref_squeeze %75 : memref<1x!tpu.dma_semaphore, #tpu.memory_space<semaphore_mem>> -> memref<!tpu.dma_semaphore, #tpu.memory_space<semaphore_mem>>
    tpu.wait_dma2 semaphore(%76 : memref<!tpu.dma_semaphore, #tpu.memory_space<semaphore_mem>>) src(%73 : memref<1x128xf32, #tpu.memory_space<any>>) dst(%74 : memref<1x128xf32, #tpu.memory_space<vmem>>)
    %c5_i32_57 = arith.constant 5 : i32
    %c0_i32_58 = arith.constant 0 : i32
    %c0_i32_59 = arith.constant 0 : i32
    %77 = tpu.memref_slice %arg2[%c0_i32_58, %c0_i32_59] : memref<128x128xf32, #tpu.memory_space<any>> -> memref<1x128xf32, #tpu.memory_space<any>>
    %c5_i32_60 = arith.constant 5 : i32
    %c0_i32_61 = arith.constant 0 : i32
    %78 = tpu.memref_slice %arg3[%c5_i32_60, %c0_i32_61] : memref<8x128xf32, #tpu.memory_space<vmem>> -> memref<1x128xf32, #tpu.memory_space<vmem>>
    %79 = tpu.memref_slice %arg4[%c5_i32_57] : memref<8x!tpu.dma_semaphore, #tpu.memory_space<semaphore_mem>> -> memref<1x!tpu.dma_semaphore, #tpu.memory_space<semaphore_mem>>
    %80 = tpu.memref_squeeze %79 : memref<1x!tpu.dma_semaphore, #tpu.memory_space<semaphore_mem>> -> memref<!tpu.dma_semaphore, #tpu.memory_space<semaphore_mem>>
    tpu.wait_dma2 semaphore(%80 : memref<!tpu.dma_semaphore, #tpu.memory_space<semaphore_mem>>) src(%77 : memref<1x128xf32, #tpu.memory_space<any>>) dst(%78 : memref<1x128xf32, #tpu.memory_space<vmem>>)
    %c6_i32_62 = arith.constant 6 : i32
    %c0_i32_63 = arith.constant 0 : i32
    %c0_i32_64 = arith.constant 0 : i32
    %81 = tpu.memref_slice %arg2[%c0_i32_63, %c0_i32_64] : memref<128x128xf32, #tpu.memory_space<any>> -> memref<1x128xf32, #tpu.memory_space<any>>
    %c6_i32_65 = arith.constant 6 : i32
    %c0_i32_66 = arith.constant 0 : i32
    %82 = tpu.memref_slice %arg3[%c6_i32_65, %c0_i32_66] : memref<8x128xf32, #tpu.memory_space<vmem>> -> memref<1x128xf32, #tpu.memory_space<vmem>>
    %83 = tpu.memref_slice %arg4[%c6_i32_62] : memref<8x!tpu.dma_semaphore, #tpu.memory_space<semaphore_mem>> -> memref<1x!tpu.dma_semaphore, #tpu.memory_space<semaphore_mem>>
    %84 = tpu.memref_squeeze %83 : memref<1x!tpu.dma_semaphore, #tpu.memory_space<semaphore_mem>> -> memref<!tpu.dma_semaphore, #tpu.memory_space<semaphore_mem>>
    tpu.wait_dma2 semaphore(%84 : memref<!tpu.dma_semaphore, #tpu.memory_space<semaphore_mem>>) src(%81 : memref<1x128xf32, #tpu.memory_space<any>>) dst(%82 : memref<1x128xf32, #tpu.memory_space<vmem>>)
    %c7_i32_67 = arith.constant 7 : i32
    %c0_i32_68 = arith.constant 0 : i32
    %c0_i32_69 = arith.constant 0 : i32
    %85 = tpu.memref_slice %arg2[%c0_i32_68, %c0_i32_69] : memref<128x128xf32, #tpu.memory_space<any>> -> memref<1x128xf32, #tpu.memory_space<any>>
    %c7_i32_70 = arith.constant 7 : i32
    %c0_i32_71 = arith.constant 0 : i32
    %86 = tpu.memref_slice %arg3[%c7_i32_70, %c0_i32_71] : memref<8x128xf32, #tpu.memory_space<vmem>> -> memref<1x128xf32, #tpu.memory_space<vmem>>
    %87 = tpu.memref_slice %arg4[%c7_i32_67] : memref<8x!tpu.dma_semaphore, #tpu.memory_space<semaphore_mem>> -> memref<1x!tpu.dma_semaphore, #tpu.memory_space<semaphore_mem>>
    %88 = tpu.memref_squeeze %87 : memref<1x!tpu.dma_semaphore, #tpu.memory_space<semaphore_mem>> -> memref<!tpu.dma_semaphore, #tpu.memory_space<semaphore_mem>>
    tpu.wait_dma2 semaphore(%88 : memref<!tpu.dma_semaphore, #tpu.memory_space<semaphore_mem>>) src(%85 : memref<1x128xf32, #tpu.memory_space<any>>) dst(%86 : memref<1x128xf32, #tpu.memory_space<vmem>>)
    return
  }
  func.func @transform_1(%arg0: i32, %arg1: memref<16xi32, #tpu.memory_space<smem>>) -> (i32, i32) {
    %c0_i32 = arith.constant 0 : i32
    %c0_i32_0 = arith.constant 0 : i32
    return %arg0, %c0_i32 : i32, i32
  }
}

</mosaic_0001>

<llo_original>
// kernel: tpu_custom_call.1
$region0: #{tpu_custom_call.1}
  #allocation0 [shape = 'u32[]', space=smem, size = 0x4, offset = 0x4, fixed_abs, tag = 'smem constant byte address 0x4 - core index']
  #allocation1 [shape = 'u32[72,128]{1,0:T(1,128)}', space=vmem, size = 0x9000, scoped, tag = 'internal scratch']
  #allocation2 [shape = 's32[8]{0}', space=sflag, size = 0x20, scoped, tag = 'scratch operand']
  #allocation3 [shape = 's32[1]{0}', space=sflag, size = 0x4, scoped, tag = 'scoped memory for tpu_custom_call.1']
  #allocation4 [shape = 'u8[512]{0}', space=smem, size = 0x200, scoped, tag = 'prefetched SMEM operand 0']
  #allocation7 [shape = 's32[]', space=sflag, size = 0x4, offset = 0, fixed_abs, tag = 'sflag constant byte address 0x0 - dummy sync flag']
  #allocation8 [shape = 's32[]', space=sflag, size = 0x4, offset = 0, fixed_abs, tag = 'sflag constant byte address 0x0 - dummy sync flag']
  #allocation9 [shape = 'u32[]', space=smem, size = 0x4, offset = 0x44, fixed_abs, tag = 'smem constant byte address 0x44 - assertion arg 0']
  #allocation10 [shape = 'u32[]', space=smem, size = 0x4, offset = 0x48, fixed_abs, tag = 'smem constant byte address 0x48 - assertion arg 1']
  #allocation11 [shape = 's32[]', space=sflag, size = 0x4, offset = 0, fixed_abs, tag = 'sflag constant byte address 0x0 - dummy sync flag']
  #allocation12 [shape = 's32[]', space=sflag, size = 0x4, offset = 0, fixed_abs, tag = 'sflag constant byte address 0x0 - dummy sync flag']
  #allocation13 [shape = 's32[]', space=sflag, size = 0x4, offset = 0, fixed_abs, tag = 'sflag constant byte address 0x0 - dummy sync flag']
  #allocation14 [shape = 's32[]', space=sflag, size = 0x4, offset = 0, fixed_abs, tag = 'sflag constant byte address 0x0 - dummy sync flag']
  #allocation15 [shape = 's32[]', space=sflag, size = 0x4, offset = 0, fixed_abs, tag = 'sflag constant byte address 0x0 - dummy sync flag']
  #allocation16 [shape = 's32[]', space=sflag, size = 0x4, offset = 0, fixed_abs, tag = 'sflag constant byte address 0x0 - dummy sync flag']
  #allocation17 [shape = 's32[]', space=sflag, size = 0x4, offset = 0, fixed_abs, tag = 'sflag constant byte address 0x0 - dummy sync flag']
  #allocation18 [shape = 's32[]', space=sflag, size = 0x4, offset = 0, fixed_abs, tag = 'sflag constant byte address 0x0 - dummy sync flag']
  #allocation19 [shape = 's32[]', space=sflag, size = 0x4, offset = 0, fixed_abs, tag = 'sflag constant byte address 0x0 - dummy sync flag']
  #allocation20 [shape = 's32[]', space=sflag, size = 0x4, offset = 0, fixed_abs, tag = 'sflag constant byte address 0x0 - dummy sync flag']
  #allocation21 [shape = 's32[]', space=sflag, size = 0x4, offset = 0, fixed_abs, tag = 'sflag constant byte address 0x0 - dummy sync flag']
  #allocation22 [shape = 's32[]', space=sflag, size = 0x4, offset = 0, fixed_abs, tag = 'sflag constant byte address 0x0 - dummy sync flag']
  #allocation23 [shape = 's32[]', space=sflag, size = 0x4, offset = 0, fixed_abs, tag = 'sflag constant byte address 0x0 - dummy sync flag']
  #allocation24 [shape = 's32[]', space=sflag, size = 0x4, offset = 0, fixed_abs, tag = 'sflag constant byte address 0x0 - dummy sync flag']
  %s0 = inlined_call_operand.hbm [shape: s32[16], index: 0, kind: input, shape index: {}]
  %s1 = inlined_call_operand.hbm [shape: f32[128,128], index: 1, kind: input, shape index: {}]
  %s2 = inlined_call_operand.hbm [shape: f32[16,128], index: 2, kind: output, shape index: {}]
  %s3 = sld [smem:[#allocation0]]
  $region57: #{tpu_custom_call.1} parent=0
    _
  %s5 = ssub.s32 1, %s3
  %s6 = scalar_select 0, %s5, %s3
  %s8 = sshll.u32 %s0, 4
  %s9 = int_to_ptr.hbm [resolvable:$true] %s8
  %11 = dma.hbm_to_smem %s9, 16, [#allocation4], [#allocation3]
  %13 = dma.done [#allocation3], 16
  %14 = sfence
  $region1: #{tpu_custom_call.1} parent=0
    #allocation5 [shape = 'u8[8192]{0}', space=vmem, size = 0x2000, scoped, tag = 'output window, operand 0']
    #allocation6 [shape = 's32[2]{0}', space=sflag, size = 0x8, scoped, tag = 'scoped memory for tpu_custom_call.1']
    %15 = vsyncpa [#allocation6], 0
    %s16 = scalar_lea.sflag [#allocation6], 1
    %17 = vsyncpa %s16, 0
    loop: start=0, step=1, limit=3
    $region2: #{tpu_custom_call.1} parent=1 // loop_pre_header
      _
    $region3: #{tpu_custom_call.1} parent=1 // loop_header
      %s19 = sphi 0, %s23
      %p20 = scmp.ge.s32.totalorder %s19, 3
      %s28 = sphi 0, %s30
      %s31 = sphi 0, %s28
      %s41 = sphi 0, %s31
    $region4: #{tpu_custom_call.1} parent=1 // loop_header_branch
      %22 = sbr.rel (%p20) target = $region8
    $region5: #{tpu_custom_call.1} parent=1 // loop_body
      %s24 = ssub.s32 %s19, 1
      %s25 = sadd.s32 %s19, 1
      %s26 = ssub.s32 %s19, %s25
      %p27 = scmp.eq.s32.totalorder %s26, 0
      %s29 = sadd.s32 %s28, 1
      %s30 = scalar_select %p27, %s28, %s29
      %p32 = pneg %p27
      %p33 = scmp.eq.s32.totalorder %s19, 1
      %p34 = por %p32, %p33
      %p35 = scmp.ne.s32.totalorder %s28, %s31
      %p36 = scmp.eq.s32.totalorder %s19, 0
      %p37 = por %p35, %p36
      %p38 = scmp.ne.s32.totalorder %s28, %s31
      %p39 = scmp.eq.s32.totalorder %s24, 1
      %p40 = por %p38, %p39
      %p42 = scmp.ne.s32.totalorder %s31, %s41
      %p43 = scmp.eq.s32.totalorder %s24, 0
      %p44 = por %p42, %p43
      %p45 = scmp.lt.s32.totalorder %s19, 2
      // Predicated region
      $region9: #{tpu_custom_call.1} parent=5 // pred_check
        %p46 = pneg %p45
      $region10: #{tpu_custom_call.1} parent=5 // pred_check_branch
        %48 = sbr.rel (%p46) target = $region12
      $region11: #{tpu_custom_call.1} parent=5 // pred_region
        %p49 = pneg %p37
        %p50 = pneg %p34
        %s51 = sand.u32 %s28, 1
        %s52 = scalar_lea.sflag [#allocation6], %s51
        %s53 = sand.u32 %s28, 1
        %s54 = smul.addr %s53, 8
        %s55 = scalar_lea.vmem [#allocation5], %s54
        %s56 = smul.u32 %s19, 8
        %s57 = sld [smem:[#allocation4 + %s56]]
        %s58 = scalar_lea.hbm %s1, %s57
        // Predicated region
        $region13: #{tpu_custom_call.1} parent=11 // pred_check
          _
        $region14: #{tpu_custom_call.1} parent=11 // pred_check_branch
          %60 = sbr.rel target = $region16
        $region15: #{tpu_custom_call.1} parent=11 // pred_region
          %61 = sst [smem:[#allocation9]] [#allocation8]
          %62 = sst [smem:[#allocation10]] [#allocation7]
        $region16: #{tpu_custom_call.1} parent=11 // pred_fallthru
          _
        %64 = shalt.err (0)
        %s66 = sshll.u32 %s58, 4
        %s67 = int_to_ptr.hbm [resolvable:$true] %s66
        %s68 = sshll.u32 %s55, 4
        %s69 = int_to_ptr.vmem [resolvable:$true] %s68
        %71 = dma.hbm_to_vmem [thread:$0]  %s67, 16, %s69, [#allocation2]
        %s72 = sadd.s32 %s56, 1
        %s73 = sld [smem:[#allocation4 + %s72]]
        %s74 = scalar_lea.hbm %s1, %s73
        %s75 = scalar_lea.vmem %s55, 1 [#allocation5]
        %s76 = scalar_lea.sflag [#allocation2], 1
        // Predicated region
        $region17: #{tpu_custom_call.1} parent=11 // pred_check
          _
        $region18: #{tpu_custom_call.1} parent=11 // pred_check_branch
          %78 = sbr.rel target = $region20
        $region19: #{tpu_custom_call.1} parent=11 // pred_region
          %79 = sst [smem:[#allocation9]] [#allocation12]
          %80 = sst [smem:[#allocation10]] [#allocation11]
        $region20: #{tpu_custom_call.1} parent=11 // pred_fallthru
          _
        %82 = shalt.err (0)
        %s84 = sshll.u32 %s74, 4
        %s85 = int_to_ptr.hbm [resolvable:$true] %s84
        %s86 = sshll.u32 %s75, 4
        %s87 = int_to_ptr.vmem [resolvable:$true] %s86
        %89 = dma.hbm_to_vmem [thread:$0]  %s85, 16, %s87, %s76
        %s90 = sadd.s32 %s56, 2
        %s91 = sld [smem:[#allocation4 + %s90]]
        %s92 = scalar_lea.hbm %s1, %s91
        %s93 = scalar_lea.vmem %s55, 2 [#allocation5]
        %s94 = scalar_lea.sflag [#allocation2], 2
        // Predicated region
        $region21: #{tpu_custom_call.1} parent=11 // pred_check
          _
        $region22: #{tpu_custom_call.1} parent=11 // pred_check_branch
          %96 = sbr.rel target = $region24
        $region23: #{tpu_custom_call.1} parent=11 // pred_region
          %97 = sst [smem:[#allocation9]] [#allocation14]
          %98 = sst [smem:[#allocation10]] [#allocation13]
        $region24: #{tpu_custom_call.1} parent=11 // pred_fallthru
          _
        %100 = shalt.err (0)
        %s102 = sshll.u32 %s92, 4
        %s103 = int_to_ptr.hbm [resolvable:$true] %s102
        %s104 = sshll.u32 %s93, 4
        %s105 = int_to_ptr.vmem [resolvable:$true] %s104
        %107 = dma.hbm_to_vmem [thread:$0]  %s103, 16, %s105, %s94
        %s108 = sadd.s32 %s56, 3
        %s109 = sld [smem:[#allocation4 + %s108]]
        %s110 = scalar_lea.hbm %s1, %s109
        %s111 = scalar_lea.vmem %s55, 3 [#allocation5]
        %s112 = scalar_lea.sflag [#allocation2], 3
        // Predicated region
        $region25: #{tpu_custom_call.1} parent=11 // pred_check
          _
        $region26: #{tpu_custom_call.1} parent=11 // pred_check_branch
          %114 = sbr.rel target = $region28
        $region27: #{tpu_custom_call.1} parent=11 // pred_region
          %115 = sst [smem:[#allocation9]] [#allocation16]
          %116 = sst [smem:[#allocation10]] [#allocation15]
        $region28: #{tpu_custom_call.1} parent=11 // pred_fallthru
          _
        %118 = shalt.err (0)
        %s120 = sshll.u32 %s110, 4
        %s121 = int_to_ptr.hbm [resolvable:$true] %s120
        %s122 = sshll.u32 %s111, 4
        %s123 = int_to_ptr.vmem [resolvable:$true] %s122
        %125 = dma.hbm_to_vmem [thread:$0]  %s121, 16, %s123, %s112
        %s126 = sadd.s32 %s56, 4
        %s127 = sld [smem:[#allocation4 + %s126]]
        %s128 = scalar_lea.hbm %s1, %s127
        %s129 = scalar_lea.vmem %s55, 4 [#allocation5]
        %s130 = scalar_lea.sflag [#allocation2], 4
        // Predicated region
        $region29: #{tpu_custom_call.1} parent=11 // pred_check
          _
        $region30: #{tpu_custom_call.1} parent=11 // pred_check_branch
          %132 = sbr.rel target = $region32
        $region31: #{tpu_custom_call.1} parent=11 // pred_region
          %133 = sst [smem:[#allocation9]] [#allocation18]
          %134 = sst [smem:[#allocation10]] [#allocation17]
        $region32: #{tpu_custom_call.1} parent=11 // pred_fallthru
          _
        %136 = shalt.err (0)
        %s138 = sshll.u32 %s128, 4
        %s139 = int_to_ptr.hbm [resolvable:$true] %s138
        %s140 = sshll.u32 %s129, 4
        %s141 = int_to_ptr.vmem [resolvable:$true] %s140
        %143 = dma.hbm_to_vmem [thread:$0]  %s139, 16, %s141, %s130
        %s144 = sadd.s32 %s56, 5
        %s145 = sld [smem:[#allocation4 + %s144]]
        %s146 = scalar_lea.hbm %s1, %s145
        %s147 = scalar_lea.vmem %s55, 5 [#allocation5]
        %s148 = scalar_lea.sflag [#allocation2], 5
        // Predicated region
        $region33: #{tpu_custom_call.1} parent=11 // pred_check
          _
        $region34: #{tpu_custom_call.1} parent=11 // pred_check_branch
          %150 = sbr.rel target = $region36
        $region35: #{tpu_custom_call.1} parent=11 // pred_region
          %151 = sst [smem:[#allocation9]] [#allocation20]
          %152 = sst [smem:[#allocation10]] [#allocation19]
        $region36: #{tpu_custom_call.1} parent=11 // pred_fallthru
          _
        %154 = shalt.err (0)
        %s156 = sshll.u32 %s146, 4
        %s157 = int_to_ptr.hbm [resolvable:$true] %s156
        %s158 = sshll.u32 %s147, 4
        %s159 = int_to_ptr.vmem [resolvable:$true] %s158
        %161 = dma.hbm_to_vmem [thread:$0]  %s157, 16, %s159, %s148
        %s162 = sadd.s32 %s56, 6
        %s163 = sld [smem:[#allocation4 + %s162]]
        %s164 = scalar_lea.hbm %s1, %s163
        %s165 = scalar_lea.vmem %s55, 6 [#allocation5]
        %s166 = scalar_lea.sflag [#allocation2], 6
        // Predicated region
        $region37: #{tpu_custom_call.1} parent=11 // pred_check
          _
        $region38: #{tpu_custom_call.1} parent=11 // pred_check_branch
          %168 = sbr.rel target = $region40
        $region39: #{tpu_custom_call.1} parent=11 // pred_region
          %169 = sst [smem:[#allocation9]] [#allocation22]
          %170 = sst [smem:[#allocation10]] [#allocation21]
        $region40: #{tpu_custom_call.1} parent=11 // pred_fallthru
          _
        %172 = shalt.err (0)
        %s174 = sshll.u32 %s164, 4
        %s175 = int_to_ptr.hbm [resolvable:$true] %s174
        %s176 = sshll.u32 %s165, 4
        %s177 = int_to_ptr.vmem [resolvable:$true] %s176
        %179 = dma.hbm_to_vmem [thread:$0]  %s175, 16, %s177, %s166
        %s180 = sadd.s32 %s56, 7
        %s181 = sld [smem:[#allocation4 + %s180]]
        %s182 = scalar_lea.hbm %s1, %s181
        %s183 = scalar_lea.vmem %s55, 7 [#allocation5]
        %s184 = scalar_lea.sflag [#allocation2], 7
        // Predicated region
        $region41: #{tpu_custom_call.1} parent=11 // pred_check
          _
        $region42: #{tpu_custom_call.1} parent=11 // pred_check_branch
          %186 = sbr.rel target = $region44
        $region43: #{tpu_custom_call.1} parent=11 // pred_region
          %187 = sst [smem:[#allocation9]] [#allocation24]
          %188 = sst [smem:[#allocation10]] [#allocation23]
        $region44: #{tpu_custom_call.1} parent=11 // pred_fallthru
          _
        %190 = shalt.err (0)
        %s192 = sshll.u32 %s182, 4
        %s193 = int_to_ptr.hbm [resolvable:$true] %s192
        %s194 = sshll.u32 %s183, 4
        %s195 = int_to_ptr.vmem [resolvable:$true] %s194
        %197 = dma.hbm_to_vmem [thread:$0]  %s193, 16, %s195, %s184
        %s198 = smul.u32 1, 1
        %s199 = sshll.u32 %s198, 4
        %200 = dma.done [#allocation2], %s199
        %s201 = sshll.u32 %s198, 4
        %202 = dma.done %s76, %s201
        %s203 = sshll.u32 %s198, 4
        %204 = dma.done %s94, %s203
        %s205 = sshll.u32 %s198, 4
        %206 = dma.done %s112, %s205
        %s207 = sshll.u32 %s198, 4
        %208 = dma.done %s130, %s207
        %s209 = sshll.u32 %s198, 4
        %210 = dma.done %s148, %s209
        %s211 = sshll.u32 %s198, 4
        %212 = dma.done %s166, %s211
        %s213 = sshll.u32 %s198, 4
        %214 = dma.done %s184, %s213
        %s215 = sand.u32 %s28, 1
        %s216 = scalar_lea.sflag [#allocation6], %s215
        %s217 = sand.u32 %s28, 1
        %s218 = smul.addr %s217, 8
        %s219 = scalar_lea.vmem [#allocation5], %s218
        // Predicated region
        $region45: #{tpu_custom_call.1} parent=11 // pred_check
          %p220 = pneg %p34
        $region46: #{tpu_custom_call.1} parent=11 // pred_check_branch
          %222 = sbr.rel (%p220) target = $region48
        $region47: #{tpu_custom_call.1} parent=11 // pred_region
          %224 = vsyncadd %s216, 0
          %s225 = smul.addr %s19, 8
          %s226 = scalar_lea.hbm %s2, %s225
          %s228 = sshll.u32 %s219, 4
          %s229 = int_to_ptr.vmem [resolvable:$true] %s228
          %s230 = sshll.u32 %s226, 4
          %s231 = int_to_ptr.hbm [resolvable:$true] %s230
          %233 = dma.vmem_to_hbm [thread:$0]  %s229, 128, %s231, %s216
        $region48: #{tpu_custom_call.1} parent=11 // pred_fallthru
          _
      $region12: #{tpu_custom_call.1} parent=5 // pred_fallthru
        _
      %p234 = scmp.le.s32.totalorder 1, %s19
      // Predicated region
      $region49: #{tpu_custom_call.1} parent=5 // pred_check
        %p235 = pneg %p234
      $region50: #{tpu_custom_call.1} parent=5 // pred_check_branch
        %237 = sbr.rel (%p235) target = $region52
      $region51: #{tpu_custom_call.1} parent=5 // pred_region
        %s238 = ssub.s32 %s19, 1
        // Predicated region
        $region53: #{tpu_custom_call.1} parent=51 // pred_check
          %p239 = pneg %p40
        $region54: #{tpu_custom_call.1} parent=51 // pred_check_branch
          %241 = sbr.rel (%p239) target = $region56
        $region55: #{tpu_custom_call.1} parent=51 // pred_region
          %s242 = sand.u32 %s31, 1
          %s243 = scalar_lea.sflag [#allocation6], %s242
          %s244 = sand.u32 %s31, 1
          %s245 = smul.addr %s244, 8
          %s246 = scalar_lea.vmem [#allocation5], %s245
          %248 = dma.done %s243, 128
        $region56: #{tpu_custom_call.1} parent=51 // pred_fallthru
          _
      $region52: #{tpu_custom_call.1} parent=5 // pred_fallthru
        _
    $region6: #{tpu_custom_call.1} parent=1 // loop_footer
      %s23 = sadd.s32 1, %s19
    $region7: #{tpu_custom_call.1} parent=1 // loop_footer_branch
      %18 = sbr.rel target = $region3
    $region8: #{tpu_custom_call.1} parent=1 // loop_exit
      _
    %249 = vsyncpa [#allocation6], 1
    %s250 = scalar_lea.sflag [#allocation6], 1
    %251 = vsyncpa %s250, 1
  %252 = vsyncmov [#allocation2]
  %s253 = vpop.sfrf %252
  %p254 = scmp.eq.s32.totalorder %s253, 0
  %p255 = pneg %p254
  %257 = shalt.err (%p255)
  %s258 = scalar_lea.sflag [#allocation2], 1
  %259 = vsyncmov %s258
  %s260 = vpop.sfrf %259
  %p261 = scmp.eq.s32.totalorder %s260, 0
  %p262 = pneg %p261
  %264 = shalt.err (%p262)
  %s265 = scalar_lea.sflag [#allocation2], 2
  %266 = vsyncmov %s265
  %s267 = vpop.sfrf %266
  %p268 = scmp.eq.s32.totalorder %s267, 0
  %p269 = pneg %p268
  %271 = shalt.err (%p269)
  %s272 = scalar_lea.sflag [#allocation2], 3
  %273 = vsyncmov %s272
  %s274 = vpop.sfrf %273
  %p275 = scmp.eq.s32.totalorder %s274, 0
  %p276 = pneg %p275
  %278 = shalt.err (%p276)
  %s279 = scalar_lea.sflag [#allocation2], 4
  %280 = vsyncmov %s279
  %s281 = vpop.sfrf %280
  %p282 = scmp.eq.s32.totalorder %s281, 0
  %p283 = pneg %p282
  %285 = shalt.err (%p283)
  %s286 = scalar_lea.sflag [#allocation2], 5
  %287 = vsyncmov %s286
  %s288 = vpop.sfrf %287
  %p289 = scmp.eq.s32.totalorder %s288, 0
  %p290 = pneg %p289
  %292 = shalt.err (%p290)
  %s293 = scalar_lea.sflag [#allocation2], 6
  %294 = vsyncmov %s293
  %s295 = vpop.sfrf %294
  %p296 = scmp.eq.s32.totalorder %s295, 0
  %p297 = pneg %p296
  %299 = shalt.err (%p297)
  %s300 = scalar_lea.sflag [#allocation2], 7
  %301 = vsyncmov %s300
  %s302 = vpop.sfrf %301
  %p303 = scmp.eq.s32.totalorder %s302, 0
  %p304 = pneg %p303
  %306 = shalt.err (%p304)

</llo_original>
